<compile_context>
chip_gen: v7x
topology: tpu7x:2x2x1
jax: 0.10.0
libtpu: 0.0.40
codegen_flags: <defaults>
</compile_context>

<pallas_src>
import math
import jax
import jax.numpy as jnp
from jax.experimental import pallas as pl
from jax.experimental.pallas import tpu as pltpu

# Model hyper-parameters (small, consistent with the module's forward).
D_MODEL = 32
N_HEAD = 4
HD = N_HEAD * D_MODEL          # 128 — one full lane width
BATCH = 2
NTOK = 8

# SuN is an undefined module-level global in the source file; fix it to a
# deterministic constant here.
SUN = 1.0
SUN_HALF = SUN / 2.0
NEG_INV_SQRT_D = -1.0 / math.sqrt(D_MODEL)


def _block_kernel(x_ref, wfused_ref, bfused_ref, bsum_ref, rred_ref,
                  wfan_ref, bfan_ref, o_ref):
    """One tile of tokens: full residual-attention-block forward ('self' branch)."""
    x = x_ref[...].astype(jnp.float32)                                  # (tm, D)

    # Fused projection: [q - k | vf] = x @ W_fused + b_fused   (tm, 2*H*D)
    proj = jnp.dot(x, wfused_ref[...], preferred_element_type=jnp.float32)
    proj = proj + bfused_ref[...]
    diff = proj[:, :HD]                                                 # q - k  (tm, 128)
    vf = proj[:, HD:]                                                   # vf     (tm, 128)

    # Per-head L1 distance, broadcast back over each head's D lanes via MXU.
    absd = jnp.abs(diff)                                                # (tm, 128)
    s = jnp.dot(absd, bsum_ref[...], preferred_element_type=jnp.float32)  # (tm, 128)
    a = jax.nn.sigmoid(s * NEG_INV_SQRT_D)                              # (tm, 128)

    # b = sum_h vf_h * a_h  — head reduction on the MXU.
    b = jnp.dot(vf * a, rred_ref[...], preferred_element_type=jnp.float32)  # (tm, D)

    # QuickGELU with the SuN/2 shift.
    yq = b + SUN_HALF
    y = yq * jax.nn.sigmoid(1.702 * yq) - SUN_HALF

    # fanin linear + residual.
    y = jnp.dot(y, wfan_ref[...], preferred_element_type=jnp.float32)
    y = y + bfan_ref[...]
    o_ref[...] = (x + y).astype(o_ref.dtype)


def prepare_kernel_params(params):
    """One-time param prep (done outside the per-call path)."""
    H, D = N_HEAD, D_MODEL
    wqv_w = params["wqv_w"]                      # (3*H*D, D)
    wqv_b = params["wqv_b"]                      # (3*H*D,)
    wq_t = wqv_w[:HD].T                          # (D, H*D)   q projection
    wvf_t = wqv_w[HD:2 * HD].T                   # (D, H*D)   vf projection (vb dropped)
    bq = wqv_b[:HD]
    bvf = wqv_b[HD:2 * HD]

    # k = x * wk[h]  is linear in x:  k_all = x @ wk_expand, block-diag(diag(wk[h])).
    wk = params["wk"]                            # (H, D)
    eye_d = jnp.eye(D, dtype=jnp.float32)
    wk_expand = jnp.concatenate([eye_d * wk[h][None, :] for h in range(H)], axis=1)  # (D, H*D)

    w_fused = jnp.concatenate([wq_t - wk_expand, wvf_t], axis=1)         # (D, 2*H*D)
    b_fused = jnp.concatenate([bq, bvf]).reshape(1, 2 * HD)              # (1, 2*H*D)

    # Constant block matrices for the per-head L1 sum/broadcast and head reduction.
    bsum = jnp.kron(jnp.eye(H), jnp.ones((D, D))).astype(jnp.float32)    # (H*D, H*D)
    rred = jnp.kron(jnp.ones((H, 1)), jnp.eye(D)).astype(jnp.float32)    # (H*D, D)

    wfan_t = params["fanin_w"].T                                          # (D, D)
    bfan = params["fanin_b"].reshape(1, D)                                # (1, D)
    return {"w_fused": w_fused, "b_fused": b_fused, "bsum": bsum,
            "rred": rred, "wfan_t": wfan_t, "bfan": bfan}


def _choose_tile(n):
    # All tokens in one step when small; 256-row tiles (multiple of 128/256 so
    # v5e/v6e MXU rows are well used, and grid > 1 keeps v7x's 2nd TC busy).
    if n >= 256:
        return 256
    return max(8, ((n + 7) // 8) * 8)


def residual_attention_block(x, kparams):
    """x: (B, T, D) float32 -> (B, T, D) float32."""
    B, T, D = x.shape
    assert D == D_MODEL
    n = B * T
    x2 = x.reshape(n, D)

    tile = _choose_tile(n)
    n_pad = pl.cdiv(n, tile) * tile
    if n_pad != n:
        x2 = jnp.pad(x2, ((0, n_pad - n), (0, 0)))   # padded rows sliced off below

    grid = (n_pad // tile,)
    out = pl.pallas_call(
        _block_kernel,
        out_shape=jax.ShapeDtypeStruct((n_pad, D), jnp.float32),
        grid_spec=pltpu.PrefetchScalarGridSpec(
            num_scalar_prefetch=0,
            grid=grid,
            in_specs=[
                pl.BlockSpec((tile, D), lambda i: (i, 0)),          # x tile
                pl.BlockSpec((D, 2 * HD), lambda i: (0, 0)),        # fused proj weights
                pl.BlockSpec((1, 2 * HD), lambda i: (0, 0)),        # fused proj bias
                pl.BlockSpec((HD, HD), lambda i: (0, 0)),           # per-head L1 sum matrix
                pl.BlockSpec((HD, D), lambda i: (0, 0)),            # head-reduction matrix
                pl.BlockSpec((D, D), lambda i: (0, 0)),             # fanin^T
                pl.BlockSpec((1, D), lambda i: (0, 0)),             # fanin bias
            ],
            out_specs=pl.BlockSpec((tile, D), lambda i: (i, 0)),
        ),
        compiler_params=pltpu.CompilerParams(
            dimension_semantics=("parallel",)),
    )(x2, kparams["w_fused"], kparams["b_fused"], kparams["bsum"],
      kparams["rred"], kparams["wfan_t"], kparams["bfan"])
    return out[:n].reshape(B, T, D)


def reference_forward(x, params):
    """Pure-JAX reference of the 'self' branch of ResidualAttentionBlock.forward."""
    B, T, D = x.shape
    v = x @ params["wqv_w"].T + params["wqv_b"]              # (B,T,3*H*D)
    v = v.reshape(B, T, 3 * N_HEAD, D)
    q, vf, _vb = jnp.split(v, 3, axis=2)                     # each (B,T,H,D)
    k = x[:, :, None, :] * params["wk"][None, None, :, :]    # (B,T,H,D)
    a = jnp.sum(jnp.abs(q - k), axis=-1) * NEG_INV_SQRT_D    # (B,T,H)
    a = jnp.exp(a)
    a = a / (a + 1.0)
    b = vf * a[..., None]                                    # (B,T,H,D)
    b = jnp.sum(b, axis=2)                                   # (B,T,D)
    yq = b + SUN_HALF
    y = yq * jax.nn.sigmoid(1.702 * yq) - SUN_HALF
    y = y @ params["fanin_w"].T + params["fanin_b"]
    return x + y


def make_params(key):
    k1, k2, k3 = jax.random.split(key, 3)
    # wqv: Linear(d, 3*H*d) with normal(0, 0.005) weights, zero bias (initWeights).
    wqv_w = 0.005 * jax.random.normal(k1, (3 * N_HEAD * D_MODEL, D_MODEL), jnp.float32)
    wqv_b = jnp.zeros((3 * N_HEAD * D_MODEL,), jnp.float32)
    # wk = 0.005 * ones(n_head, d_model)
    wk = 0.005 * jnp.ones((N_HEAD, D_MODEL), jnp.float32)
    # fanin: Linear(d, d) with PyTorch-default-like uniform(-1/sqrt(d), 1/sqrt(d)).
    bound = 1.0 / math.sqrt(D_MODEL)
    fanin_w = jax.random.uniform(k2, (D_MODEL, D_MODEL), jnp.float32, -bound, bound)
    fanin_b = jax.random.uniform(k3, (D_MODEL,), jnp.float32, -bound, bound)
    return {"wqv_w": wqv_w, "wqv_b": wqv_b, "wk": wk,
            "fanin_w": fanin_w, "fanin_b": fanin_b}


if __name__ == "__main__":
    key = jax.random.PRNGKey(0)
    kx, kp = jax.random.split(key)
    x = jax.random.normal(kx, (BATCH, NTOK, D_MODEL), jnp.float32)
    params = make_params(kp)
    kparams = prepare_kernel_params(params)

    out = residual_attention_block(x, kparams)
    out = jax.block_until_ready(out)

    ref = reference_forward(x, params)
    assert out.shape == ref.shape == (BATCH, NTOK, D_MODEL)
    assert jnp.allclose(out, ref, atol=1e-4, rtol=1e-4), \
        f"max abs err {jnp.max(jnp.abs(out - ref))}"
    print("KERNEL_OK")
</pallas_src>

<mosaic_0001>
module attributes {stable_mosaic.version = 11 : i64} {
  func.func @_block_kernel(%arg0: i32, %arg1: memref<16x32xf32, #tpu.memory_space<vmem>>, %arg2: memref<32x256xf32, #tpu.memory_space<vmem>>, %arg3: memref<1x256xf32, #tpu.memory_space<vmem>>, %arg4: memref<128x128xf32, #tpu.memory_space<vmem>>, %arg5: memref<128x32xf32, #tpu.memory_space<vmem>>, %arg6: memref<32x32xf32, #tpu.memory_space<vmem>>, %arg7: memref<1x32xf32, #tpu.memory_space<vmem>>, %arg8: memref<16x32xf32, #tpu.memory_space<vmem>>) attributes {dimension_semantics = [#tpu.dimension_semantics<parallel>], iteration_bounds = array<i64: 1>, scalar_prefetch = 0 : i64, scratch_operands = 0 : i64, tpu.core_type = #tpu.core_type<tc>, window_params = [{transform_indices = @transform_0, window_bounds = array<i64: 16, 32>}, {pipeline_mode = #tpu.pipeline_mode<synchronous>, transform_indices = @transform_1, window_bounds = array<i64: 32, 256>}, {pipeline_mode = #tpu.pipeline_mode<synchronous>, transform_indices = @transform_2, window_bounds = array<i64: 1, 256>}, {pipeline_mode = #tpu.pipeline_mode<synchronous>, transform_indices = @transform_3, window_bounds = array<i64: 128, 128>}, {pipeline_mode = #tpu.pipeline_mode<synchronous>, transform_indices = @transform_4, window_bounds = array<i64: 128, 32>}, {pipeline_mode = #tpu.pipeline_mode<synchronous>, transform_indices = @transform_5, window_bounds = array<i64: 32, 32>}, {pipeline_mode = #tpu.pipeline_mode<synchronous>, transform_indices = @transform_6, window_bounds = array<i64: 1, 32>}, {transform_indices = @transform_7, window_bounds = array<i64: 16, 32>}]} {
    %c0 = arith.constant 0 : index
    %c0_0 = arith.constant 0 : index
    %0 = vector.load %arg1[%c0, %c0_0] : memref<16x32xf32, #tpu.memory_space<vmem>>, vector<16x32xf32>
    %c0_1 = arith.constant 0 : index
    %c0_2 = arith.constant 0 : index
    %1 = vector.load %arg2[%c0_1, %c0_2] : memref<32x256xf32, #tpu.memory_space<vmem>>, vector<32x256xf32>
    %cst = arith.constant dense<0.000000e+00> : vector<16x256xf32>
    %2 = tpu.matmul %0, %1, %cst {dimension_numbers = #tpu.dot_dimension_numbers<[1], [0], [0], [1], [0, 0, 1, 1], [], []>} : vector<16x32xf32>, vector<32x256xf32>, vector<16x256xf32> -> vector<16x256xf32>
    %c0_3 = arith.constant 0 : index
    %c0_4 = arith.constant 0 : index
    %3 = vector.load %arg3[%c0_3, %c0_4] : memref<1x256xf32, #tpu.memory_space<vmem>>, vector<1x256xf32>
    %4 = vector.broadcast %3 : vector<1x256xf32> to vector<16x256xf32>
    %5 = arith.addf %2, %4 : vector<16x256xf32>
    %6 = vector.extract_strided_slice %5 {offsets = [0, 0], sizes = [16, 128], strides = [1, 1]} : vector<16x256xf32> to vector<16x128xf32>
    %7 = vector.extract_strided_slice %5 {offsets = [0, 128], sizes = [16, 128], strides = [1, 1]} : vector<16x256xf32> to vector<16x128xf32>
    %8 = math.absf %6 : vector<16x128xf32>
    %c0_5 = arith.constant 0 : index
    %c0_6 = arith.constant 0 : index
    %9 = vector.load %arg4[%c0_5, %c0_6] : memref<128x128xf32, #tpu.memory_space<vmem>>, vector<128x128xf32>
    %cst_7 = arith.constant dense<0.000000e+00> : vector<16x128xf32>
    %10 = tpu.matmul %8, %9, %cst_7 {dimension_numbers = #tpu.dot_dimension_numbers<[1], [0], [0], [1], [0, 0, 1, 1], [], []>} : vector<16x128xf32>, vector<128x128xf32>, vector<16x128xf32> -> vector<16x128xf32>
    %cst_8 = arith.constant -0.176776692 : f32
    %11 = vector.broadcast %cst_8 : f32 to vector<16x128xf32>
    %12 = arith.mulf %10, %11 : vector<16x128xf32>
    %13 = arith.negf %12 : vector<16x128xf32>
    %14 = math.exp %13 : vector<16x128xf32>
    %cst_9 = arith.constant 1.000000e+00 : f32
    %15 = vector.broadcast %cst_9 : f32 to vector<16x128xf32>
    %16 = arith.addf %15, %14 : vector<16x128xf32>
    %17 = arith.divf %15, %16 : vector<16x128xf32>
    %18 = arith.mulf %7, %17 : vector<16x128xf32>
    %c0_10 = arith.constant 0 : index
    %c0_11 = arith.constant 0 : index
    %19 = vector.load %arg5[%c0_10, %c0_11] : memref<128x32xf32, #tpu.memory_space<vmem>>, vector<128x32xf32>
    %cst_12 = arith.constant dense<0.000000e+00> : vector<16x32xf32>
    %20 = tpu.matmul %18, %19, %cst_12 {dimension_numbers = #tpu.dot_dimension_numbers<[1], [0], [0], [1], [0, 0, 1, 1], [], []>} : vector<16x128xf32>, vector<128x32xf32>, vector<16x32xf32> -> vector<16x32xf32>
    %cst_13 = arith.constant 5.000000e-01 : f32
    %21 = vector.broadcast %cst_13 : f32 to vector<16x32xf32>
    %22 = arith.addf %20, %21 : vector<16x32xf32>
    %cst_14 = arith.constant 1.702000e+00 : f32
    %23 = vector.broadcast %cst_14 : f32 to vector<16x32xf32>
    %24 = arith.mulf %23, %22 : vector<16x32xf32>
    %25 = arith.negf %24 : vector<16x32xf32>
    %26 = math.exp %25 : vector<16x32xf32>
    %cst_15 = arith.constant 1.000000e+00 : f32
    %27 = vector.broadcast %cst_15 : f32 to vector<16x32xf32>
    %28 = arith.addf %27, %26 : vector<16x32xf32>
    %29 = arith.divf %27, %28 : vector<16x32xf32>
    %30 = arith.mulf %22, %29 : vector<16x32xf32>
    %cst_16 = arith.constant 5.000000e-01 : f32
    %31 = vector.broadcast %cst_16 : f32 to vector<16x32xf32>
    %32 = arith.subf %30, %31 : vector<16x32xf32>
    %c0_17 = arith.constant 0 : index
    %c0_18 = arith.constant 0 : index
    %33 = vector.load %arg6[%c0_17, %c0_18] : memref<32x32xf32, #tpu.memory_space<vmem>>, vector<32x32xf32>
    %cst_19 = arith.constant dense<0.000000e+00> : vector<16x32xf32>
    %34 = tpu.matmul %32, %33, %cst_19 {dimension_numbers = #tpu.dot_dimension_numbers<[1], [0], [0], [1], [0, 0, 1, 1], [], []>} : vector<16x32xf32>, vector<32x32xf32>, vector<16x32xf32> -> vector<16x32xf32>
    %c0_20 = arith.constant 0 : index
    %c0_21 = arith.constant 0 : index
    %35 = vector.load %arg7[%c0_20, %c0_21] : memref<1x32xf32, #tpu.memory_space<vmem>>, vector<1x32xf32>
    %36 = vector.broadcast %35 : vector<1x32xf32> to vector<16x32xf32>
    %37 = arith.addf %34, %36 : vector<16x32xf32>
    %38 = arith.addf %0, %37 : vector<16x32xf32>
    %c0_22 = arith.constant 0 : index
    %c0_23 = arith.constant 0 : index
    %39 = vector.load %arg8[%c0_22, %c0_23] : memref<16x32xf32, #tpu.memory_space<vmem>>, vector<16x32xf32>
    tpu.vector_store %arg8[%c0_22, %c0_23], %38 {strides = array<i32>} : memref<16x32xf32, #tpu.memory_space<vmem>>, vector<16x32xf32>,
    return
  }
  func.func @transform_0(%arg0: i32) -> (i32, i32) {
    %c0_i32 = arith.constant 0 : i32
    %c0_i32_0 = arith.constant 0 : i32
    return %arg0, %c0_i32 : i32, i32
  }
  func.func @transform_1(%arg0: i32) -> (i32, i32) {
    %c0_i32 = arith.constant 0 : i32
    %c0_i32_0 = arith.constant 0 : i32
    %c0_i32_1 = arith.constant 0 : i32
    return %c0_i32, %c0_i32_0 : i32, i32
  }
  func.func @transform_2(%arg0: i32) -> (i32, i32) {
    %c0_i32 = arith.constant 0 : i32
    %c0_i32_0 = arith.constant 0 : i32
    %c0_i32_1 = arith.constant 0 : i32
    return %c0_i32, %c0_i32_0 : i32, i32
  }
  func.func @transform_3(%arg0: i32) -> (i32, i32) {
    %c0_i32 = arith.constant 0 : i32
    %c0_i32_0 = arith.constant 0 : i32
    %c0_i32_1 = arith.constant 0 : i32
    return %c0_i32, %c0_i32_0 : i32, i32
  }
  func.func @transform_4(%arg0: i32) -> (i32, i32) {
    %c0_i32 = arith.constant 0 : i32
    %c0_i32_0 = arith.constant 0 : i32
    %c0_i32_1 = arith.constant 0 : i32
    return %c0_i32, %c0_i32_0 : i32, i32
  }
  func.func @transform_5(%arg0: i32) -> (i32, i32) {
    %c0_i32 = arith.constant 0 : i32
    %c0_i32_0 = arith.constant 0 : i32
    %c0_i32_1 = arith.constant 0 : i32
    return %c0_i32, %c0_i32_0 : i32, i32
  }
  func.func @transform_6(%arg0: i32) -> (i32, i32) {
    %c0_i32 = arith.constant 0 : i32
    %c0_i32_0 = arith.constant 0 : i32
    %c0_i32_1 = arith.constant 0 : i32
    return %c0_i32, %c0_i32_0 : i32, i32
  }
  func.func @transform_7(%arg0: i32) -> (i32, i32) {
    %c0_i32 = arith.constant 0 : i32
    %c0_i32_0 = arith.constant 0 : i32
    return %arg0, %c0_i32 : i32, i32
  }
}

</mosaic_0001>

<llo_original>
// kernel: tpu_custom_call.1
$region0: #{tpu_custom_call.1}
  #allocation0 [shape = 'u32[]', space=smem, size = 0x4, offset = 0x4, fixed_abs, tag = 'smem constant byte address 0x4 - core index']
  #allocation1 [shape = 'u32[144,128]{1,0:T(1,128)}', space=vmem, size = 0x12000, scoped, tag = 'internal scratch']
  %s0 = inlined_call_operand.hbm [shape: f32[16,32], index: 0, kind: input, shape index: {}]
  %s1 = inlined_call_operand.hbm [shape: f32[32,256], index: 1, kind: input, shape index: {}]
  %s2 = inlined_call_operand.vmem [shape: f32[1,256], index: 2, kind: input, shape index: {}]
  %s3 = inlined_call_operand.vmem [shape: f32[128,128], index: 3, kind: input, shape index: {}]
  %s4 = inlined_call_operand.vmem [shape: f32[128,32], index: 4, kind: input, shape index: {}]
  %s5 = inlined_call_operand.vmem [shape: f32[32,32], index: 5, kind: input, shape index: {}]
  %s6 = inlined_call_operand.vmem [shape: f32[1,32], index: 6, kind: input, shape index: {}]
  %s7 = inlined_call_operand.hbm [shape: f32[16,32], index: 7, kind: output, shape index: {}]
  %s8 = sld [smem:[#allocation0]]
  $region46: #{tpu_custom_call.1} parent=0
    _
  %s10 = ssub.s32 1, %s8
  %s11 = scalar_select 0, %s10, %s8
  $region1: #{tpu_custom_call.1} parent=0
    #allocation2 [shape = 'u8[8192]{0}', space=vmem, size = 0x2000, scoped, tag = 'input window, operand 0, single buffered']
    #allocation3 [shape = 's32[1]{0}', space=sflag, size = 0x4, scoped, tag = 'scoped memory for tpu_custom_call.1']
    #allocation4 [shape = 's32[1]{0}', space=sflag, size = 0x4, scoped, tag = 'scoped memory for tpu_custom_call.1']
    #allocation5 [shape = 'u8[32768]{0}', space=vmem, size = 0x8000, scoped, tag = 'input window, operand 1, single buffered']
    #allocation6 [shape = 's32[1]{0}', space=sflag, size = 0x4, scoped, tag = 'scoped memory for tpu_custom_call.1']
    #allocation7 [shape = 'u8[8192]{0}', space=vmem, size = 0x2000, scoped, tag = 'output window, operand 0, single buffered']
    %12 = vsyncpa [#allocation3], 0
    %13 = vsyncpa [#allocation6], 0
    %14 = vsyncpa [#allocation4], 0
    // Predicated region
    $region2: #{tpu_custom_call.1} parent=1 // pred_check
      _
    $region3: #{tpu_custom_call.1} parent=1 // pred_check_branch
      %16 = sbr.rel (0) target = $region5
    $region4: #{tpu_custom_call.1} parent=1 // pred_region
      %s18 = ssub.s32 256, 256
      %19 = vsyncadd [#allocation3], %s18
      %s20 = sshll.u32 [#allocation2], 4
      %s21 = int_to_ptr.vmem [resolvable:$true] %s20
      %26 = dma.hbm_to_vmem [thread:$0]  %s0, 256, %s21, [#allocation3], 128, 128, 8
    $region5: #{tpu_custom_call.1} parent=1 // pred_fallthru
      _
    // Predicated region
    $region6: #{tpu_custom_call.1} parent=1 // pred_check
      _
    $region7: #{tpu_custom_call.1} parent=1 // pred_check_branch
      %28 = sbr.rel (0) target = $region9
    $region8: #{tpu_custom_call.1} parent=1 // pred_region
      %s30 = ssub.s32 1024, 1024
      %31 = vsyncadd [#allocation6], %s30
      %s32 = sshll.u32 [#allocation5], 4
      %s33 = int_to_ptr.vmem [resolvable:$true] %s32
      %38 = dma.hbm_to_vmem [thread:$0]  %s1, 1024, %s33, [#allocation6], 256, 256, 16
    $region9: #{tpu_custom_call.1} parent=1 // pred_fallthru
      _
    // Predicated region
    $region10: #{tpu_custom_call.1} parent=1 // pred_check
      _
    $region11: #{tpu_custom_call.1} parent=1 // pred_check_branch
      %40 = sbr.rel (0) target = $region13
    $region12: #{tpu_custom_call.1} parent=1 // pred_region
      _
    $region13: #{tpu_custom_call.1} parent=1 // pred_fallthru
      _
    // Predicated region
    $region14: #{tpu_custom_call.1} parent=1 // pred_check
      _
    $region15: #{tpu_custom_call.1} parent=1 // pred_check_branch
      %42 = sbr.rel (0) target = $region17
    $region16: #{tpu_custom_call.1} parent=1 // pred_region
      _
    $region17: #{tpu_custom_call.1} parent=1 // pred_fallthru
      _
    // Predicated region
    $region18: #{tpu_custom_call.1} parent=1 // pred_check
      _
    $region19: #{tpu_custom_call.1} parent=1 // pred_check_branch
      %44 = sbr.rel (0) target = $region21
    $region20: #{tpu_custom_call.1} parent=1 // pred_region
      _
    $region21: #{tpu_custom_call.1} parent=1 // pred_fallthru
      _
    // Predicated region
    $region22: #{tpu_custom_call.1} parent=1 // pred_check
      _
    $region23: #{tpu_custom_call.1} parent=1 // pred_check_branch
      %46 = sbr.rel (0) target = $region25
    $region24: #{tpu_custom_call.1} parent=1 // pred_region
      _
    $region25: #{tpu_custom_call.1} parent=1 // pred_fallthru
      _
    // Predicated region
    $region26: #{tpu_custom_call.1} parent=1 // pred_check
      _
    $region27: #{tpu_custom_call.1} parent=1 // pred_check_branch
      %48 = sbr.rel (0) target = $region29
    $region28: #{tpu_custom_call.1} parent=1 // pred_region
      _
    $region29: #{tpu_custom_call.1} parent=1 // pred_fallthru
      _
    // Predicated region
    $region30: #{tpu_custom_call.1} parent=1 // pred_check
      _
    $region31: #{tpu_custom_call.1} parent=1 // pred_check_branch
      %50 = sbr.rel (0) target = $region33
    $region32: #{tpu_custom_call.1} parent=1 // pred_region
      %51 = dma.done [#allocation3], 256
    $region33: #{tpu_custom_call.1} parent=1 // pred_fallthru
      _
    // Predicated region
    $region34: #{tpu_custom_call.1} parent=1 // pred_check
      _
    $region35: #{tpu_custom_call.1} parent=1 // pred_check_branch
      %53 = sbr.rel (0) target = $region37
    $region36: #{tpu_custom_call.1} parent=1 // pred_region
      %54 = dma.done [#allocation6], 1024
    $region37: #{tpu_custom_call.1} parent=1 // pred_fallthru
      _
    %v55 = vld [vmem:[#allocation2] sm:$0xff]
    %v56 = vld [vmem:[#allocation2 + $0x8] sm:$0xff]
    %v57 = vld [vmem:[#allocation5] sm:$0xff]
    %v58 = vld [vmem:[#allocation5 + $0x8] sm:$0xff]
    %v59 = vld [vmem:[#allocation5 + $0x10] sm:$0xff]
    %v60 = vld [vmem:[#allocation5 + $0x18] sm:$0xff]
    %v61 = vld [vmem:[#allocation5 + $0x20] sm:$0xff]
    %v62 = vld [vmem:[#allocation5 + $0x28] sm:$0xff]
    %v63 = vld [vmem:[#allocation5 + $0x30] sm:$0xff]
    %v64 = vld [vmem:[#allocation5 + $0x38] sm:$0xff]
    %v65 = vld [vmem:[%s2] sm:$0x3]
    %v67 = vlaneseq
    %v68 = vshrl.u32 %v67, 7
    %v69 = vsub.s32 0, %v68
    %v70 = vrot.slane %v65, %v69
    %v71 = vlaneseq
    %v72 = vshrl.u32 %v71, 7
    %v73 = vsub.s32 1, %v72
    %v74 = vrot.slane %v65, %v73
    %vm77 = vcmask 261120
    %v79 = vsel %vm77, %v55, 0
    %v82 = vsel %vm77, %v56, 0
    %84 = vmatprep.subr.mxu0 %v58
    %85 = vmatpush1.msra.mxu0 %v57
    %86 = vmatprep.subr.mxu0 %v60
    %87 = vmatpush1.msra.mxu0 %v59
    %88 = vmatprep.subr.mxu0 %v62
    %89 = vmatpush1.msra.mxu0 %v61
    %90 = vmatprep.subr.mxu0 %v64
    %91 = vmatpush1.msra.mxu0 %v63
    %92 = vmatprep.subr.mxu0 0.0
    %93 = vmatpush1.msra.mxu0 0.0
    %94 = vmatprep.subr.mxu0 0.0
    %95 = vmatpush1.msra.mxu0 0.0
    %96 = vmatprep.subr.mxu0 0.0
    %97 = vmatpush1.msra.mxu0 0.0
    %98 = vmatprep.subr.mxu0 0.0
    %99 = vmatpush1.msra.mxu0 0.0
    %100 = vmatprep.subr.mxu0 0.0
    %101 = vmatpush1.msra.mxu0 0.0
    %102 = vmatprep.subr.mxu0 0.0
    %103 = vmatpush1.msra.mxu0 0.0
    %104 = vmatprep.subr.mxu0 0.0
    %105 = vmatpush1.msra.mxu0 0.0
    %106 = vmatprep.subr.mxu0 0.0
    %107 = vmatpush1.msra.mxu0 0.0
    %108 = vmatprep.subr.mxu0 0.0
    %109 = vmatpush1.msra.mxu0 0.0
    %110 = vmatprep.subr.mxu0 0.0
    %111 = vmatpush1.msra.mxu0 0.0
    %112 = vmatprep.subr.mxu0 0.0
    %113 = vmatpush1.msra.mxu0 0.0
    %114 = vmatprep.subr.mxu0 0.0
    %115 = vmatpush1.msra.mxu0 0.0
    %116 = vmatprep.subr.mxu0 0.0
    %117 = vmatpush1.msra.mxu0 0.0
    %118 = vmatprep.subr.mxu0 0.0
    %119 = vmatpush1.msra.mxu0 0.0
    %120 = vmatprep.subr.mxu0 0.0
    %121 = vmatpush1.msra.mxu0 0.0
    %122 = vmatprep.subr.mxu0 0.0
    %123 = vmatpush1.msra.mxu0 0.0
    %124 = vmatprep.subr.mxu0 0.0
    %125 = vmatpush1.msra.mxu0 0.0
    %126 = vmatprep.subr.mxu0 0.0
    %127 = vmatpush1.msra.mxu0 0.0
    %128 = vmatprep.subr.mxu0 0.0
    %129 = vmatpush1.msra.mxu0 0.0
    %130 = vmatprep.subr.mxu0 0.0
    %131 = vmatpush1.msra.mxu0 0.0
    %132 = vmatprep.subr.mxu0 0.0
    %133 = vmatpush1.msra.mxu0 0.0
    %134 = vmatprep.subr.mxu0 0.0
    %135 = vmatpush1.msra.mxu0 0.0
    %136 = vmatprep.subr.mxu0 0.0
    %137 = vmatpush1.msra.mxu0 0.0
    %138 = vmatprep.subr.mxu0 0.0
    %139 = vmatpush1.msra.mxu0 0.0
    %140 = vmatprep.subr.mxu0 0.0
    %141 = vmatpush1.msra.mxu0 0.0
    %142 = vmatprep.subr.mxu0 0.0
    %143 = vmatpush1.msra.mxu0 0.0
    %144 = vmatprep.subr.mxu0 0.0
    %145 = vmatpush1.msra.mxu0 0.0
    %146 = vmatprep.subr.mxu0 0.0
    %147 = vmatpush1.msra.mxu0 0.0
    %148 = vmatprep.mubr.f32.mxu0 0.0
    %149 = vmatmul.mubr.f32.gmra.mrb[0].mxu0 %v79
    %v150 = vpop.f32.mrb[0].mxu0
    %v151 = vadd.f32 %v70, %v150
    %v152 = vpop.f32.mrb[0].mxu0
    %v153 = vadd.f32 %v74, %v152
    %154 = vmatprep.mubr.f32.mxu0 0.0
    %155 = vmatmul.mubr.f32.gmra.mrb[0].mxu0 %v82
    %v156 = vpop.f32.mrb[0].mxu0
    %v157 = vadd.f32 %v70, %v156
    %v158 = vpop.f32.mrb[0].mxu0
    %v159 = vadd.f32 %v74, %v158
    %160 = vdwg.mxu0
    %v161 = vand.u32 2147483647, %v151
    %v162 = vand.u32 2147483647, %v157
    %v163 = vld [vmem:[%s3] sm:$0xff]
    %v164 = vld [vmem:[%s3 + $0x8] sm:$0xff]
    %v165 = vld [vmem:[%s3 + $0x10] sm:$0xff]
    %v166 = vld [vmem:[%s3 + $0x18] sm:$0xff]
    %v167 = vld [vmem:[%s3 + $0x20] sm:$0xff]
    %v168 = vld [vmem:[%s3 + $0x28] sm:$0xff]
    %v169 = vld [vmem:[%s3 + $0x30] sm:$0xff]
    %v170 = vld [vmem:[%s3 + $0x38] sm:$0xff]
    %v171 = vld [vmem:[%s3 + $0x40] sm:$0xff]
    %v172 = vld [vmem:[%s3 + $0x48] sm:$0xff]
    %v173 = vld [vmem:[%s3 + $0x50] sm:$0xff]
    %v174 = vld [vmem:[%s3 + $0x58] sm:$0xff]
    %v175 = vld [vmem:[%s3 + $0x60] sm:$0xff]
    %v176 = vld [vmem:[%s3 + $0x68] sm:$0xff]
    %v177 = vld [vmem:[%s3 + $0x70] sm:$0xff]
    %v178 = vld [vmem:[%s3 + $0x78] sm:$0xff]
    %179 = vmatprep.subr.mxu0 0.0
    %180 = vmatpush1.msra.mxu0 %v163
    %181 = vmatprep.subr.mxu0 0.0
    %182 = vmatpush1.msra.mxu0 %v164
    %183 = vmatprep.subr.mxu0 0.0
    %184 = vmatpush1.msra.mxu0 %v165
    %185 = vmatprep.subr.mxu0 0.0
    %186 = vmatpush1.msra.mxu0 %v166
    %187 = vmatprep.subr.mxu0 0.0
    %188 = vmatpush1.msra.mxu0 %v167
    %189 = vmatprep.subr.mxu0 0.0
    %190 = vmatpush1.msra.mxu0 %v168
    %191 = vmatprep.subr.mxu0 0.0
    %192 = vmatpush1.msra.mxu0 %v169
    %193 = vmatprep.subr.mxu0 0.0
    %194 = vmatpush1.msra.mxu0 %v170
    %195 = vmatprep.subr.mxu0 0.0
    %196 = vmatpush1.msra.mxu0 %v171
    %197 = vmatprep.subr.mxu0 0.0
    %198 = vmatpush1.msra.mxu0 %v172
    %199 = vmatprep.subr.mxu0 0.0
    %200 = vmatpush1.msra.mxu0 %v173
    %201 = vmatprep.subr.mxu0 0.0
    %202 = vmatpush1.msra.mxu0 %v174
    %203 = vmatprep.subr.mxu0 0.0
    %204 = vmatpush1.msra.mxu0 %v175
    %205 = vmatprep.subr.mxu0 0.0
    %206 = vmatpush1.msra.mxu0 %v176
    %207 = vmatprep.subr.mxu0 0.0
    %208 = vmatpush1.msra.mxu0 %v177
    %209 = vmatprep.subr.mxu0 0.0
    %210 = vmatpush1.msra.mxu0 %v178
    %211 = vmatprep.subr.mxu0 0.0
    %212 = vmatpush1.msra.mxu0 0.0
    %213 = vmatprep.subr.mxu0 0.0
    %214 = vmatpush1.msra.mxu0 0.0
    %215 = vmatprep.subr.mxu0 0.0
    %216 = vmatpush1.msra.mxu0 0.0
    %217 = vmatprep.subr.mxu0 0.0
    %218 = vmatpush1.msra.mxu0 0.0
    %219 = vmatprep.subr.mxu0 0.0
    %220 = vmatpush1.msra.mxu0 0.0
    %221 = vmatprep.subr.mxu0 0.0
    %222 = vmatpush1.msra.mxu0 0.0
    %223 = vmatprep.subr.mxu0 0.0
    %224 = vmatpush1.msra.mxu0 0.0
    %225 = vmatprep.subr.mxu0 0.0
    %226 = vmatpush1.msra.mxu0 0.0
    %227 = vmatprep.subr.mxu0 0.0
    %228 = vmatpush1.msra.mxu0 0.0
    %229 = vmatprep.subr.mxu0 0.0
    %230 = vmatpush1.msra.mxu0 0.0
    %231 = vmatprep.subr.mxu0 0.0
    %232 = vmatpush1.msra.mxu0 0.0
    %233 = vmatprep.subr.mxu0 0.0
    %234 = vmatpush1.msra.mxu0 0.0
    %235 = vmatprep.subr.mxu0 0.0
    %236 = vmatpush1.msra.mxu0 0.0
    %237 = vmatprep.subr.mxu0 0.0
    %238 = vmatpush1.msra.mxu0 0.0
    %239 = vmatprep.subr.mxu0 0.0
    %240 = vmatpush1.msra.mxu0 0.0
    %241 = vmatprep.subr.mxu0 0.0
    %242 = vmatpush1.msra.mxu0 0.0
    %243 = vmatprep.mubr.f32.mxu0 0.0
    %244 = vmatmul.mubr.f32.gmra.mrb[0].mxu0 %v161
    %v245 = vpop.f32.mrb[0].mxu0
    %v246 = vadd.f32 0.0, %v245
    %v247 = vpop.f32.mrb[0].mxu0
    %248 = vmatprep.mubr.f32.mxu0 0.0
    %249 = vmatmul.mubr.f32.gmra.mrb[0].mxu0 %v162
    %v250 = vpop.f32.mrb[0].mxu0
    %v251 = vadd.f32 0.0, %v250
    %v252 = vpop.f32.mrb[0].mxu0
    %253 = vdwg.mxu0
    %v254 = vmul.f32 %v246, -0.17677669
    %v255 = vmul.f32 %v251, -0.17677669
    %v256 = vxor.u32 %v254, 2147483648
    %v257 = vxor.u32 %v255, 2147483648
    %v258 = vmul.f32 %v256, 1.442695
    %v259 = vpow.pop %v258
    %v260 = vmul.f32 %v257, 1.442695
    %v261 = vpow.pop %v260
    %v262 = vadd.f32 %v259, 1.0
    %v263 = vadd.f32 %v261, 1.0
    %v264 = vrcp.pop %v262
    %v265 = vmul.f32 1.0, %v264
    %v266 = vrcp.pop %v263
    %v267 = vmul.f32 1.0, %v266
    %v268 = vmul.f32 %v153, %v265
    %v269 = vmul.f32 %v159, %v267
    %v270 = vld [vmem:[%s4] sm:$0xff]
    %v271 = vld [vmem:[%s4 + $0x8] sm:$0xff]
    %v272 = vld [vmem:[%s4 + $0x10] sm:$0xff]
    %v273 = vld [vmem:[%s4 + $0x18] sm:$0xff]
    %v274 = vld [vmem:[%s4 + $0x20] sm:$0xff]
    %v275 = vld [vmem:[%s4 + $0x28] sm:$0xff]
    %v276 = vld [vmem:[%s4 + $0x30] sm:$0xff]
    %v277 = vld [vmem:[%s4 + $0x38] sm:$0xff]
    %v278 = vld [vmem:[%s4 + $0x40] sm:$0xff]
    %v279 = vld [vmem:[%s4 + $0x48] sm:$0xff]
    %v280 = vld [vmem:[%s4 + $0x50] sm:$0xff]
    %v281 = vld [vmem:[%s4 + $0x58] sm:$0xff]
    %v282 = vld [vmem:[%s4 + $0x60] sm:$0xff]
    %v283 = vld [vmem:[%s4 + $0x68] sm:$0xff]
    %v284 = vld [vmem:[%s4 + $0x70] sm:$0xff]
    %v285 = vld [vmem:[%s4 + $0x78] sm:$0xff]
    %286 = vmatprep.subr.mxu0 0.0
    %287 = vmatpush1.msra.mxu0 %v270
    %288 = vmatprep.subr.mxu0 0.0
    %289 = vmatpush1.msra.mxu0 %v271
    %290 = vmatprep.subr.mxu0 0.0
    %291 = vmatpush1.msra.mxu0 %v272
    %292 = vmatprep.subr.mxu0 0.0
    %293 = vmatpush1.msra.mxu0 %v273
    %294 = vmatprep.subr.mxu0 0.0
    %295 = vmatpush1.msra.mxu0 %v274
    %296 = vmatprep.subr.mxu0 0.0
    %297 = vmatpush1.msra.mxu0 %v275
    %298 = vmatprep.subr.mxu0 0.0
    %299 = vmatpush1.msra.mxu0 %v276
    %300 = vmatprep.subr.mxu0 0.0
    %301 = vmatpush1.msra.mxu0 %v277
    %302 = vmatprep.subr.mxu0 0.0
    %303 = vmatpush1.msra.mxu0 %v278
    %304 = vmatprep.subr.mxu0 0.0
    %305 = vmatpush1.msra.mxu0 %v279
    %306 = vmatprep.subr.mxu0 0.0
    %307 = vmatpush1.msra.mxu0 %v280
    %308 = vmatprep.subr.mxu0 0.0
    %309 = vmatpush1.msra.mxu0 %v281
    %310 = vmatprep.subr.mxu0 0.0
    %311 = vmatpush1.msra.mxu0 %v282
    %312 = vmatprep.subr.mxu0 0.0
    %313 = vmatpush1.msra.mxu0 %v283
    %314 = vmatprep.subr.mxu0 0.0
    %315 = vmatpush1.msra.mxu0 %v284
    %316 = vmatprep.subr.mxu0 0.0
    %317 = vmatpush1.msra.mxu0 %v285
    %318 = vmatprep.subr.mxu0 0.0
    %319 = vmatpush1.msra.mxu0 0.0
    %320 = vmatprep.subr.mxu0 0.0
    %321 = vmatpush1.msra.mxu0 0.0
    %322 = vmatprep.subr.mxu0 0.0
    %323 = vmatpush1.msra.mxu0 0.0
    %324 = vmatprep.subr.mxu0 0.0
    %325 = vmatpush1.msra.mxu0 0.0
    %326 = vmatprep.subr.mxu0 0.0
    %327 = vmatpush1.msra.mxu0 0.0
    %328 = vmatprep.subr.mxu0 0.0
    %329 = vmatpush1.msra.mxu0 0.0
    %330 = vmatprep.subr.mxu0 0.0
    %331 = vmatpush1.msra.mxu0 0.0
    %332 = vmatprep.subr.mxu0 0.0
    %333 = vmatpush1.msra.mxu0 0.0
    %334 = vmatprep.subr.mxu0 0.0
    %335 = vmatpush1.msra.mxu0 0.0
    %336 = vmatprep.subr.mxu0 0.0
    %337 = vmatpush1.msra.mxu0 0.0
    %338 = vmatprep.subr.mxu0 0.0
    %339 = vmatpush1.msra.mxu0 0.0
    %340 = vmatprep.subr.mxu0 0.0
    %341 = vmatpush1.msra.mxu0 0.0
    %342 = vmatprep.subr.mxu0 0.0
    %343 = vmatpush1.msra.mxu0 0.0
    %344 = vmatprep.subr.mxu0 0.0
    %345 = vmatpush1.msra.mxu0 0.0
    %346 = vmatprep.subr.mxu0 0.0
    %347 = vmatpush1.msra.mxu0 0.0
    %348 = vmatprep.subr.mxu0 0.0
    %349 = vmatpush1.msra.mxu0 0.0
    %350 = vmatprep.mubr.f32.mxu0 0.0
    %351 = vmatmul.mubr.f32.gmra.mrb[0].mxu0 %v268
    %v352 = vpop.f32.mrb[0].mxu0
    %v353 = vadd.f32 0.5, %v352
    %v354 = vpop.f32.mrb[0].mxu0
    %355 = vmatprep.mubr.f32.mxu0 0.0
    %356 = vmatmul.mubr.f32.gmra.mrb[0].mxu0 %v269
    %v357 = vpop.f32.mrb[0].mxu0
    %v358 = vadd.f32 0.5, %v357
    %v359 = vpop.f32.mrb[0].mxu0
    %360 = vdwg.mxu0
    %v361 = vmul.f32 %v353, 1.702
    %v362 = vmul.f32 %v358, 1.702
    %v363 = vxor.u32 %v361, 2147483648
    %v364 = vxor.u32 %v362, 2147483648
    %v365 = vmul.f32 %v363, 1.442695
    %v366 = vpow.pop %v365
    %v367 = vmul.f32 %v364, 1.442695
    %v368 = vpow.pop %v367
    %v369 = vadd.f32 %v366, 1.0
    %v370 = vadd.f32 %v368, 1.0
    %v371 = vrcp.pop %v369
    %v372 = vmul.f32 1.0, %v371
    %v373 = vrcp.pop %v370
    %v374 = vmul.f32 1.0, %v373
    %v375 = vmul.f32 %v353, %v372
    %v376 = vmul.f32 %v358, %v374
    %v377 = vsub.f32 %v375, 0.5
    %v378 = vsub.f32 %v376, 0.5
    %v379 = vld [vmem:[%s5] sm:$0xff]
    %v380 = vld [vmem:[%s5 + $0x8] sm:$0xff]
    %v381 = vld [vmem:[%s5 + $0x10] sm:$0xff]
    %v382 = vld [vmem:[%s5 + $0x18] sm:$0xff]
    %v383 = vld [vmem:[%s6] sm:$0x1]
    %v385 = vlaneseq
    %v386 = vshrl.u32 %v385, 7
    %v387 = vsub.s32 0, %v386
    %v388 = vrot.slane %v383, %v387
    %v391 = vsel %vm77, %v377, 0
    %v394 = vsel %vm77, %v378, 0
    %396 = vmatprep.subr.mxu0 0.0
    %397 = vmatpush1.msra.mxu0 %v379
    %398 = vmatprep.subr.mxu0 0.0
    %399 = vmatpush1.msra.mxu0 %v380
    %400 = vmatprep.subr.mxu0 0.0
    %401 = vmatpush1.msra.mxu0 %v381
    %402 = vmatprep.subr.mxu0 0.0
    %403 = vmatpush1.msra.mxu0 %v382
    %404 = vmatprep.subr.mxu0 0.0
    %405 = vmatpush1.msra.mxu0 0.0
    %406 = vmatprep.subr.mxu0 0.0
    %407 = vmatpush1.msra.mxu0 0.0
    %408 = vmatprep.subr.mxu0 0.0
    %409 = vmatpush1.msra.mxu0 0.0
    %410 = vmatprep.subr.mxu0 0.0
    %411 = vmatpush1.msra.mxu0 0.0
    %412 = vmatprep.subr.mxu0 0.0
    %413 = vmatpush1.msra.mxu0 0.0
    %414 = vmatprep.subr.mxu0 0.0
    %415 = vmatpush1.msra.mxu0 0.0
    %416 = vmatprep.subr.mxu0 0.0
    %417 = vmatpush1.msra.mxu0 0.0
    %418 = vmatprep.subr.mxu0 0.0
    %419 = vmatpush1.msra.mxu0 0.0
    %420 = vmatprep.subr.mxu0 0.0
    %421 = vmatpush1.msra.mxu0 0.0
    %422 = vmatprep.subr.mxu0 0.0
    %423 = vmatpush1.msra.mxu0 0.0
    %424 = vmatprep.subr.mxu0 0.0
    %425 = vmatpush1.msra.mxu0 0.0
    %426 = vmatprep.subr.mxu0 0.0
    %427 = vmatpush1.msra.mxu0 0.0
    %428 = vmatprep.subr.mxu0 0.0
    %429 = vmatpush1.msra.mxu0 0.0
    %430 = vmatprep.subr.mxu0 0.0
    %431 = vmatpush1.msra.mxu0 0.0
    %432 = vmatprep.subr.mxu0 0.0
    %433 = vmatpush1.msra.mxu0 0.0
    %434 = vmatprep.subr.mxu0 0.0
    %435 = vmatpush1.msra.mxu0 0.0
    %436 = vmatprep.subr.mxu0 0.0
    %437 = vmatpush1.msra.mxu0 0.0
    %438 = vmatprep.subr.mxu0 0.0
    %439 = vmatpush1.msra.mxu0 0.0
    %440 = vmatprep.subr.mxu0 0.0
    %441 = vmatpush1.msra.mxu0 0.0
    %442 = vmatprep.subr.mxu0 0.0
    %443 = vmatpush1.msra.mxu0 0.0
    %444 = vmatprep.subr.mxu0 0.0
    %445 = vmatpush1.msra.mxu0 0.0
    %446 = vmatprep.subr.mxu0 0.0
    %447 = vmatpush1.msra.mxu0 0.0
    %448 = vmatprep.subr.mxu0 0.0
    %449 = vmatpush1.msra.mxu0 0.0
    %450 = vmatprep.subr.mxu0 0.0
    %451 = vmatpush1.msra.mxu0 0.0
    %452 = vmatprep.subr.mxu0 0.0
    %453 = vmatpush1.msra.mxu0 0.0
    %454 = vmatprep.subr.mxu0 0.0
    %455 = vmatpush1.msra.mxu0 0.0
    %456 = vmatprep.subr.mxu0 0.0
    %457 = vmatpush1.msra.mxu0 0.0
    %458 = vmatprep.subr.mxu0 0.0
    %459 = vmatpush1.msra.mxu0 0.0
    %460 = vmatprep.mubr.f32.mxu0 0.0
    %461 = vmatmul.mubr.f32.gmra.mrb[0].mxu0 %v391
    %v462 = vpop.f32.mrb[0].mxu0
    %v463 = vadd.f32 %v388, %v462
    %v464 = vpop.f32.mrb[0].mxu0
    %465 = vmatprep.mubr.f32.mxu0 0.0
    %466 = vmatmul.mubr.f32.gmra.mrb[0].mxu0 %v394
    %v467 = vpop.f32.mrb[0].mxu0
    %v468 = vadd.f32 %v388, %v467
    %v469 = vpop.f32.mrb[0].mxu0
    %470 = vdwg.mxu0
    %v471 = vadd.f32 %v55, %v463
    %v472 = vadd.f32 %v56, %v468
    %473 = vst.msk [vmem:[#allocation7] sm:$0xff] %vm77, %v471
    %474 = vst.msk [vmem:[#allocation7 + $0x8] sm:$0xff] %vm77, %v472
    // Predicated region
    $region38: #{tpu_custom_call.1} parent=1 // pred_check
      _
    $region39: #{tpu_custom_call.1} parent=1 // pred_check_branch
      %476 = sbr.rel (0) target = $region41
    $region40: #{tpu_custom_call.1} parent=1 // pred_region
      %s478 = ssub.s32 256, 256
      %479 = vsyncadd [#allocation4], %s478
      %s480 = sshll.u32 [#allocation7], 4
      %s481 = int_to_ptr.vmem [resolvable:$true] %s480
      %486 = dma.vmem_to_hbm [thread:$0]  %s481, 256, %s7, [#allocation4], 128, 128, 8
    $region41: #{tpu_custom_call.1} parent=1 // pred_fallthru
      _
    // Predicated region
    $region42: #{tpu_custom_call.1} parent=1 // pred_check
      _
    $region43: #{tpu_custom_call.1} parent=1 // pred_check_branch
      %488 = sbr.rel (0) target = $region45
    $region44: #{tpu_custom_call.1} parent=1 // pred_region
      %489 = dma.done [#allocation4], 256
    $region45: #{tpu_custom_call.1} parent=1 // pred_fallthru
      _
    %490 = vsyncpa [#allocation3], 1
    %491 = vsyncpa [#allocation6], 1
    %492 = vsyncpa [#allocation4], 1

</llo_original>
